<compile_context>
chip_gen: v7x
topology: tpu7x:2x2x1
jax: 0.10.0
libtpu: 0.0.40
codegen_flags: <defaults>
</compile_context>

<pallas_src>
import jax
import jax.numpy as jnp
import numpy as np
from jax.experimental import pallas as pl
from jax.experimental.pallas import tpu as pltpu


def _make_kernel(nl, nr, tile_nl, tiles_per_core, img_w, dy, lane_width,
                 max_dx, length, need_mask):
    img_w = float(img_w)
    length = float(length)
    # width = lane_width * sqrt((d*img_w)^2 + dy^2) / dy = sqrt(c1*d^2 + c2)
    c1 = (float(lane_width) * img_w / float(dy)) ** 2
    c2 = float(lane_width) ** 2
    dx_thresh = float(max_dx) / img_w   # |d| > thresh  <=>  |d * img_w| > max_dx

    def kernel(pred_ref, target_ref, iou_ref, dl_ref, dr_ref):
        step = pl.program_id(1)

        @pl.when(step == 0)
        def _init():
            iou_ref[...] = jnp.zeros_like(iou_ref)
            dl_ref[...] = jnp.zeros_like(dl_ref)
            dr_ref[...] = jnp.zeros_like(dr_ref)

        pred = pred_ref[...].astype(jnp.float32)      # (nr, T): rows x lanes
        target = target_ref[...].astype(jnp.float32)

        # ---- virtual half-widths: central diff along the row (sublane) axis
        # with torch-style replication of the first/last difference at edges.
        def half_width(x, clamp_dx):
            d_mid = x[2:, :] - x[:-2, :]                          # (nr-2, T)
            d = jnp.concatenate([d_mid[:1], d_mid, d_mid[-1:]], axis=0)
            if clamp_dx:
                d = jnp.where(jnp.abs(d) > dx_thresh, 0.0, d)
            return jnp.sqrt(c1 * d * d + c2)                      # (nr, T)

        pred_w = half_width(pred, clamp_dx=False)
        tgt_w = half_width(target, clamp_dx=True)

        # ---- LaneIoU --------------------------------------------------------
        px1 = pred - pred_w
        px2 = pred + pred_w
        tx1 = target - tgt_w
        tx2 = target + tgt_w
        ovr = jnp.minimum(px2, tx2) - jnp.maximum(px1, tx1)
        union = jnp.maximum(px2, tx2) - jnp.minimum(px1, tx1)
        t_neg = target < 0.0                       # shared compare
        invalid = t_neg | (target >= 1.0)
        ovr = jnp.where(invalid, 0.0, ovr)
        union = jnp.where(invalid, 0.0, union)
        ovr_sum = jnp.sum(ovr, axis=0, keepdims=True)             # (1, T)
        union_sum = jnp.sum(union, axis=0, keepdims=True)
        lane_iou = ovr_sum / (union_sum + 1e-9)                   # exact divide

        # ---- directional IoU (aligned path), algebraically reduced:
        #   left  = target - max(pred-L, target-L) = L - max(pred-target, 0)
        #   right = min(pred+L, target+L) - target = L + min(pred-target, 0)
        diff = pred - target
        left_ovr = length - jnp.maximum(diff, 0.0)
        right_ovr = length + jnp.minimum(diff, 0.0)
        invalid_d = t_neg | (target >= img_w)
        left_ovr = jnp.where(invalid_d, 0.0, left_ovr)
        right_ovr = jnp.where(invalid_d, 0.0, right_ovr)
        left_sum = jnp.sum(left_ovr, axis=0, keepdims=True)       # (1, T)
        right_sum = jnp.sum(right_ovr, axis=0, keepdims=True)

        # ---- zero out padded lanes; only traced when padding exists --------
        if need_mask:
            col = jax.lax.broadcasted_iota(jnp.int32, (1, tile_nl), 1)
            tile_idx = pl.program_id(0) * tiles_per_core + step
            valid = tile_idx * tile_nl + col < nl
            lane_iou = jnp.where(valid, lane_iou, 0.0)
            left_sum = jnp.where(valid, left_sum, 0.0)
            right_sum = jnp.where(valid, right_sum, 0.0)

        # ---- accumulate per-core partial sums (broadcast over the (8,128)
        # accumulator block; the 1 - sum/Nl finalize happens in the wrapper).
        iou_ref[...] += jnp.sum(lane_iou, keepdims=True)
        dl_ref[...] += jnp.sum(left_sum, keepdims=True)
        dr_ref[...] += jnp.sum(right_sum, keepdims=True)

    return kernel


def dliou_loss(pred, target, eval_shape=(320, 1640), loss_weight=1.0,
               lane_width=7.5 / 800, max_dx=10000.0, length=15.0,
               all_shape=72, tile_nl=None, num_cores=None,
               inputs_transposed=False):
    """DLIoULoss forward.  Returns (LaneIoU loss, DLIoU loss, DRIoU loss).

    pred/target: (Nl, Nr) relative coords, or (Nr, Nl) when
    inputs_transposed=True (preferred for large Nl: avoids the wrapper-side
    transpose / extra HBM pass).
    """
    assert pred.shape == target.shape, \
        "prediction and target must have the same shape!"
    if inputs_transposed:
        nr, nl = pred.shape
        pred_t, target_t = pred, target
    else:
        nl, nr = pred.shape
        # TODO(synk): producing (Nr, Nl) upstream would avoid this extra HBM pass.
        pred_t, target_t = jnp.transpose(pred), jnp.transpose(target)
    assert nr >= 3
    img_h, img_w = eval_shape
    dy = img_h / (nr - 1) * 2

    if tile_nl is None:
        tile_nl = nl if nl <= 8192 else 8192
    tile_nl = min(tile_nl, nl)
    assert tile_nl == nl or tile_nl % 128 == 0, \
        "tile_nl must equal Nl or be a multiple of 128 (lane axis)"
    num_tiles = pl.cdiv(nl, tile_nl)
    if num_cores is None:
        num_cores = 2 if num_tiles >= 2 else 1   # v7x: 2 TCs; no-op on v5e/v6e
    tiles_per_core = pl.cdiv(num_tiles, num_cores)
    need_mask = num_cores * tiles_per_core * tile_nl != nl

    kernel = _make_kernel(nl, nr, tile_nl, tiles_per_core, img_w, dy,
                          lane_width, max_dx, length, need_mask)

    def in_map(c, i):
        t = c * tiles_per_core + i
        # Core-padding tiles re-read the last real block; their lanes are
        # masked out in the kernel (global lane index >= Nl).
        return (0, jnp.minimum(t, num_tiles - 1))

    in_spec = pl.BlockSpec((nr, tile_nl), in_map)
    out_spec = pl.BlockSpec((8, 128), lambda c, i: (c, 0))
    acc_shape = jax.ShapeDtypeStruct((num_cores * 8, 128), jnp.float32)

    iou_acc, dl_acc, dr_acc = pl.pallas_call(
        kernel,
        out_shape=[acc_shape] * 3,
        grid=(num_cores, tiles_per_core),
        in_specs=[in_spec, in_spec],
        out_specs=[out_spec] * 3,
        compiler_params=pltpu.CompilerParams(
            # core axis splits the Nl tiles across TensorCores (v7x); the tile
            # axis carries the fused mean reduction -> "arbitrary".
            dimension_semantics=("parallel", "arbitrary"),
            # 72 x 8192 f32 double-buffered inputs ~ 9 MiB; raise the scoped
            # limit explicitly so v5e's 16 MiB default is never a constraint.
            vmem_limit_bytes=32 * 1024 * 1024),
    )(pred_t, target_t)

    # Tiny finalize on the per-core partials, outside the kernel.
    iou_sum = jnp.sum(iou_acc[::8, 0])
    dl_sum = jnp.sum(dl_acc[::8, 0])
    dr_sum = jnp.sum(dr_acc[::8, 0])
    dir_denom = float(length) * float(all_shape) + 1e-9
    loss = (1.0 - iou_sum / nl) * loss_weight
    dl_loss = 1.0 - dl_sum / (nl * dir_denom)
    dr_loss = 1.0 - dr_sum / (nl * dir_denom)
    return loss, dl_loss, dr_loss


# ---------------- pure-JAX reference (mirrors the PyTorch module) ------------
def _ref_dliou_loss(pred, target, eval_shape=(320, 1640), loss_weight=1.0,
                    lane_width=7.5 / 800, max_dx=10000.0, length=15.0,
                    all_shape=72):
    img_h, img_w = eval_shape
    n_strips = pred.shape[1] - 1
    dy = img_h / n_strips * 2

    pred_dx = (pred[:, 2:] - pred[:, :-2]) * img_w
    pred_w = lane_width * jnp.sqrt(pred_dx ** 2 + dy ** 2) / dy
    pred_w = jnp.concatenate([pred_w[:, :1], pred_w, pred_w[:, -1:]], axis=1)
    target_dx = (target[:, 2:] - target[:, :-2]) * img_w
    target_dx = jnp.where(jnp.abs(target_dx) > max_dx, 0.0, target_dx)
    target_w = lane_width * jnp.sqrt(target_dx ** 2 + dy ** 2) / dy
    target_w = jnp.concatenate([target_w[:, :1], target_w, target_w[:, -1:]],
                               axis=1)

    px1, px2 = pred - pred_w, pred + pred_w
    tx1, tx2 = target - target_w, target + target_w
    ovr = jnp.minimum(px2, tx2) - jnp.maximum(px1, tx1)
    union = jnp.maximum(px2, tx2) - jnp.minimum(px1, tx1)
    inv = (target < 0) | (target >= 1.0)
    ovr = jnp.where(inv, 0.0, ovr)
    union = jnp.where(inv, 0.0, union)
    iou = ovr.sum(-1) / (union.sum(-1) + 1e-9)

    left_ovr = target - jnp.maximum(pred - length, target - length)
    right_ovr = jnp.minimum(pred + length, target + length) - target
    inv_d = (target < 0) | (target >= img_w)
    left_ovr = jnp.where(inv_d, 0.0, left_ovr)
    right_ovr = jnp.where(inv_d, 0.0, right_ovr)
    dliou = left_ovr.sum(-1) / (length * all_shape + 1e-9)
    driou = right_ovr.sum(-1) / (length * all_shape + 1e-9)
    return ((1 - iou).mean() * loss_weight, (1 - dliou).mean(),
            (1 - driou).mean())


if __name__ == "__main__":
    Nr = 72  # pre-defined row samples (matches all_shape=72 in the module)
    k0, k1, k2, k3 = jax.random.split(jax.random.PRNGKey(0), 4)

    # Case 1: 8 lanes x 72 rows -> single tile, single core, no masking.
    Nl = 8
    pred = jax.random.uniform(k0, (Nl, Nr), jnp.float32, -0.1, 1.1)
    target = jax.random.uniform(k1, (Nl, Nr), jnp.float32, -0.1, 1.1)
    out = dliou_loss(pred, target)
    jax.block_until_ready(out)
    ref = _ref_dliou_loss(pred, target)
    for o, r in zip(out, ref):
        np.testing.assert_allclose(np.asarray(o), np.asarray(r),
                                   rtol=1e-5, atol=1e-5)

    # Case 2: 300 lanes with 128-lane tiles -> grid (2 cores x 2 tiles): one
    # core-padding tile and a partial last tile; exercises the multi-tile
    # accumulation, the index-map clamp and the lane-validity masking paths.
    Nl2 = 300
    pred2 = jax.random.uniform(k2, (Nl2, Nr), jnp.float32, -0.1, 1.1)
    target2 = jax.random.uniform(k3, (Nl2, Nr), jnp.float32, -0.1, 1.1)
    out2 = dliou_loss(pred2, target2, tile_nl=128)
    jax.block_until_ready(out2)
    ref2 = _ref_dliou_loss(pred2, target2)
    for o, r in zip(out2, ref2):
        np.testing.assert_allclose(np.asarray(o), np.asarray(r),
                                   rtol=1e-5, atol=1e-5)

    print("KERNEL_OK")
</pallas_src>

<mosaic_0001>
module attributes {stable_mosaic.version = 11 : i64} {
  func.func @kernel(%arg0: i32, %arg1: i32, %arg2: memref<72x8xf32, #tpu.memory_space<vmem>>, %arg3: memref<72x8xf32, #tpu.memory_space<vmem>>, %arg4: memref<8x128xf32, #tpu.memory_space<vmem>>, %arg5: memref<8x128xf32, #tpu.memory_space<vmem>>, %arg6: memref<8x128xf32, #tpu.memory_space<vmem>>) attributes {dimension_semantics = [#tpu.dimension_semantics<parallel>, #tpu.dimension_semantics<arbitrary>], iteration_bounds = array<i64: 1, 1>, scalar_prefetch = 0 : i64, scratch_operands = 0 : i64, tpu.core_type = #tpu.core_type<tc>, window_params = [{transform_indices = @transform_0, window_bounds = array<i64: 72, 8>}, {transform_indices = @transform_1, window_bounds = array<i64: 72, 8>}, {transform_indices = @transform_2, window_bounds = array<i64: 8, 128>}, {transform_indices = @transform_3, window_bounds = array<i64: 8, 128>}, {transform_indices = @transform_4, window_bounds = array<i64: 8, 128>}]} {
    %c0_i32 = arith.constant 0 : i32
    %0 = arith.cmpi eq, %arg1, %c0_i32 : i32
    %1 = arith.extui %0 : i1 to i32
    %c0_i32_0 = arith.constant 0 : i32
    %2 = arith.cmpi ne, %1, %c0_i32_0 : i32
    scf.if %2 {
      %cst_40 = arith.constant 0.000000e+00 : f32
      %107 = vector.broadcast %cst_40 : f32 to vector<8x128xf32>
      %c0_41 = arith.constant 0 : index
      %c0_42 = arith.constant 0 : index
      %108 = vector.load %arg4[%c0_41, %c0_42] : memref<8x128xf32, #tpu.memory_space<vmem>>, vector<8x128xf32>
      tpu.vector_store %arg4[%c0_41, %c0_42], %107 {strides = array<i32>} : memref<8x128xf32, #tpu.memory_space<vmem>>, vector<8x128xf32>,
      %cst_43 = arith.constant 0.000000e+00 : f32
      %109 = vector.broadcast %cst_43 : f32 to vector<8x128xf32>
      %c0_44 = arith.constant 0 : index
      %c0_45 = arith.constant 0 : index
      %110 = vector.load %arg5[%c0_44, %c0_45] : memref<8x128xf32, #tpu.memory_space<vmem>>, vector<8x128xf32>
      tpu.vector_store %arg5[%c0_44, %c0_45], %109 {strides = array<i32>} : memref<8x128xf32, #tpu.memory_space<vmem>>, vector<8x128xf32>,
      %cst_46 = arith.constant 0.000000e+00 : f32
      %111 = vector.broadcast %cst_46 : f32 to vector<8x128xf32>
      %c0_47 = arith.constant 0 : index
      %c0_48 = arith.constant 0 : index
      %112 = vector.load %arg6[%c0_47, %c0_48] : memref<8x128xf32, #tpu.memory_space<vmem>>, vector<8x128xf32>
      tpu.vector_store %arg6[%c0_47, %c0_48], %111 {strides = array<i32>} : memref<8x128xf32, #tpu.memory_space<vmem>>, vector<8x128xf32>,
    } else {
    }
    %c0 = arith.constant 0 : index
    %c0_1 = arith.constant 0 : index
    %3 = vector.load %arg2[%c0, %c0_1] : memref<72x8xf32, #tpu.memory_space<vmem>>, vector<72x8xf32>
    %c0_2 = arith.constant 0 : index
    %c0_3 = arith.constant 0 : index
    %4 = vector.load %arg3[%c0_2, %c0_3] : memref<72x8xf32, #tpu.memory_space<vmem>>, vector<72x8xf32>
    %5 = vector.extract_strided_slice %3 {offsets = [2, 0], sizes = [70, 8], strides = [1, 1]} : vector<72x8xf32> to vector<70x8xf32>
    %6 = vector.extract_strided_slice %3 {offsets = [0, 0], sizes = [70, 8], strides = [1, 1]} : vector<72x8xf32> to vector<70x8xf32>
    %7 = arith.subf %5, %6 : vector<70x8xf32>
    %8 = vector.extract_strided_slice %7 {offsets = [0, 0], sizes = [1, 8], strides = [1, 1]} : vector<70x8xf32> to vector<1x8xf32>
    %9 = vector.extract_strided_slice %7 {offsets = [69, 0], sizes = [1, 8], strides = [1, 1]} : vector<70x8xf32> to vector<1x8xf32>
    %10 = tpu.concatenate %8, %7, %9 in 0 : vector<1x8xf32>, vector<70x8xf32>, vector<1x8xf32> -> vector<72x8xf32>
    %cst = arith.constant 2.90928984 : f32
    %11 = vector.broadcast %cst : f32 to vector<72x8xf32>
    %12 = arith.mulf %11, %10 : vector<72x8xf32>
    %13 = arith.mulf %12, %10 : vector<72x8xf32>
    %cst_4 = arith.constant 8.78906285E-5 : f32
    %14 = vector.broadcast %cst_4 : f32 to vector<72x8xf32>
    %15 = arith.addf %13, %14 : vector<72x8xf32>
    %16 = math.sqrt %15 : vector<72x8xf32>
    %17 = vector.extract_strided_slice %4 {offsets = [2, 0], sizes = [70, 8], strides = [1, 1]} : vector<72x8xf32> to vector<70x8xf32>
    %18 = vector.extract_strided_slice %4 {offsets = [0, 0], sizes = [70, 8], strides = [1, 1]} : vector<72x8xf32> to vector<70x8xf32>
    %19 = arith.subf %17, %18 : vector<70x8xf32>
    %20 = vector.extract_strided_slice %19 {offsets = [0, 0], sizes = [1, 8], strides = [1, 1]} : vector<70x8xf32> to vector<1x8xf32>
    %21 = vector.extract_strided_slice %19 {offsets = [69, 0], sizes = [1, 8], strides = [1, 1]} : vector<70x8xf32> to vector<1x8xf32>
    %22 = tpu.concatenate %20, %19, %21 in 0 : vector<1x8xf32>, vector<70x8xf32>, vector<1x8xf32> -> vector<72x8xf32>
    %23 = math.absf %22 : vector<72x8xf32>
    %cst_5 = arith.constant 6.09756088 : f32
    %24 = vector.broadcast %cst_5 : f32 to vector<72x8xf32>
    %25 = arith.cmpf ogt, %23, %24 : vector<72x8xf32>
    %cst_6 = arith.constant 0.000000e+00 : f32
    %26 = vector.broadcast %cst_6 : f32 to vector<72x8xf32>
    %27 = arith.select %25, %26, %22 : vector<72x8xi1>, vector<72x8xf32>
    %cst_7 = arith.constant 2.90928984 : f32
    %28 = vector.broadcast %cst_7 : f32 to vector<72x8xf32>
    %29 = arith.mulf %28, %27 : vector<72x8xf32>
    %30 = arith.mulf %29, %27 : vector<72x8xf32>
    %cst_8 = arith.constant 8.78906285E-5 : f32
    %31 = vector.broadcast %cst_8 : f32 to vector<72x8xf32>
    %32 = arith.addf %30, %31 : vector<72x8xf32>
    %33 = math.sqrt %32 : vector<72x8xf32>
    %34 = arith.subf %3, %16 : vector<72x8xf32>
    %35 = arith.addf %3, %16 : vector<72x8xf32>
    %36 = arith.subf %4, %33 : vector<72x8xf32>
    %37 = arith.addf %4, %33 : vector<72x8xf32>
    %38 = arith.minimumf %35, %37 : vector<72x8xf32>
    %39 = arith.maximumf %34, %36 : vector<72x8xf32>
    %40 = arith.subf %38, %39 : vector<72x8xf32>
    %41 = arith.maximumf %35, %37 : vector<72x8xf32>
    %42 = arith.minimumf %34, %36 : vector<72x8xf32>
    %43 = arith.subf %41, %42 : vector<72x8xf32>
    %cst_9 = arith.constant 0.000000e+00 : f32
    %44 = vector.broadcast %cst_9 : f32 to vector<72x8xf32>
    %45 = arith.cmpf olt, %4, %44 : vector<72x8xf32>
    %cst_10 = arith.constant 1.000000e+00 : f32
    %46 = vector.broadcast %cst_10 : f32 to vector<72x8xf32>
    %47 = arith.cmpf oge, %4, %46 : vector<72x8xf32>
    %48 = arith.ori %45, %47 : vector<72x8xi1>
    %cst_11 = arith.constant 0.000000e+00 : f32
    %49 = vector.broadcast %cst_11 : f32 to vector<72x8xf32>
    %50 = arith.select %48, %49, %40 : vector<72x8xi1>, vector<72x8xf32>
    %cst_12 = arith.constant 0.000000e+00 : f32
    %51 = vector.broadcast %cst_12 : f32 to vector<72x8xf32>
    %52 = arith.select %48, %51, %43 : vector<72x8xi1>, vector<72x8xf32>
    %cst_13 = arith.constant dense<0.000000e+00> : vector<8xf32>
    %53 = vector.multi_reduction <add>, %50, %cst_13 [0] : vector<72x8xf32> to vector<8xf32>
    %54 = vector.shape_cast %53 : vector<8xf32> to vector<1x8xf32>
    %cst_14 = arith.constant dense<0.000000e+00> : vector<8xf32>
    %55 = vector.multi_reduction <add>, %52, %cst_14 [0] : vector<72x8xf32> to vector<8xf32>
    %56 = vector.shape_cast %55 : vector<8xf32> to vector<1x8xf32>
    %cst_15 = arith.constant 9.99999971E-10 : f32
    %57 = vector.broadcast %cst_15 : f32 to vector<1x8xf32>
    %58 = arith.addf %56, %57 : vector<1x8xf32>
    %59 = arith.divf %54, %58 : vector<1x8xf32>
    %60 = arith.subf %3, %4 : vector<72x8xf32>
    %cst_16 = arith.constant 0.000000e+00 : f32
    %61 = vector.broadcast %cst_16 : f32 to vector<72x8xf32>
    %62 = arith.maximumf %60, %61 : vector<72x8xf32>
    %cst_17 = arith.constant 1.500000e+01 : f32
    %63 = vector.broadcast %cst_17 : f32 to vector<72x8xf32>
    %64 = arith.subf %63, %62 : vector<72x8xf32>
    %cst_18 = arith.constant 0.000000e+00 : f32
    %65 = vector.broadcast %cst_18 : f32 to vector<72x8xf32>
    %66 = arith.minimumf %60, %65 : vector<72x8xf32>
    %cst_19 = arith.constant 1.500000e+01 : f32
    %67 = vector.broadcast %cst_19 : f32 to vector<72x8xf32>
    %68 = arith.addf %67, %66 : vector<72x8xf32>
    %cst_20 = arith.constant 1.640000e+03 : f32
    %69 = vector.broadcast %cst_20 : f32 to vector<72x8xf32>
    %70 = arith.cmpf oge, %4, %69 : vector<72x8xf32>
    %71 = arith.ori %45, %70 : vector<72x8xi1>
    %cst_21 = arith.constant 0.000000e+00 : f32
    %72 = vector.broadcast %cst_21 : f32 to vector<72x8xf32>
    %73 = arith.select %71, %72, %64 : vector<72x8xi1>, vector<72x8xf32>
    %cst_22 = arith.constant 0.000000e+00 : f32
    %74 = vector.broadcast %cst_22 : f32 to vector<72x8xf32>
    %75 = arith.select %71, %74, %68 : vector<72x8xi1>, vector<72x8xf32>
    %cst_23 = arith.constant dense<0.000000e+00> : vector<8xf32>
    %76 = vector.multi_reduction <add>, %73, %cst_23 [0] : vector<72x8xf32> to vector<8xf32>
    %77 = vector.shape_cast %76 : vector<8xf32> to vector<1x8xf32>
    %cst_24 = arith.constant dense<0.000000e+00> : vector<8xf32>
    %78 = vector.multi_reduction <add>, %75, %cst_24 [0] : vector<72x8xf32> to vector<8xf32>
    %79 = vector.shape_cast %78 : vector<8xf32> to vector<1x8xf32>
    %c0_25 = arith.constant 0 : index
    %c0_26 = arith.constant 0 : index
    %80 = vector.load %arg4[%c0_25, %c0_26] : memref<8x128xf32, #tpu.memory_space<vmem>>, vector<8x128xf32>
    %81 = vector.shape_cast %59 : vector<1x8xf32> to vector<1x1x8xf32>
    %cst_27 = arith.constant dense<0.000000e+00> : vector<1xf32>
    %82 = vector.multi_reduction <add>, %81, %cst_27 [1, 2] : vector<1x1x8xf32> to vector<1xf32>
    %83 = vector.shape_cast %82 : vector<1xf32> to vector<1x1x1xf32>
    %84 = vector.extract %83[0, 0, 0] : f32 from vector<1x1x1xf32>
    %85 = vector.broadcast %84 : f32 to vector<1x1xf32>
    %86 = vector.broadcast %85 : vector<1x1xf32> to vector<8x128xf32>
    %87 = arith.addf %80, %86 : vector<8x128xf32>
    %c0_28 = arith.constant 0 : index
    %c0_29 = arith.constant 0 : index
    %88 = vector.load %arg4[%c0_28, %c0_29] : memref<8x128xf32, #tpu.memory_space<vmem>>, vector<8x128xf32>
    tpu.vector_store %arg4[%c0_28, %c0_29], %87 {strides = array<i32>} : memref<8x128xf32, #tpu.memory_space<vmem>>, vector<8x128xf32>,
    %c0_30 = arith.constant 0 : index
    %c0_31 = arith.constant 0 : index
    %89 = vector.load %arg5[%c0_30, %c0_31] : memref<8x128xf32, #tpu.memory_space<vmem>>, vector<8x128xf32>
    %90 = vector.shape_cast %77 : vector<1x8xf32> to vector<1x1x8xf32>
    %cst_32 = arith.constant dense<0.000000e+00> : vector<1xf32>
    %91 = vector.multi_reduction <add>, %90, %cst_32 [1, 2] : vector<1x1x8xf32> to vector<1xf32>
    %92 = vector.shape_cast %91 : vector<1xf32> to vector<1x1x1xf32>
    %93 = vector.extract %92[0, 0, 0] : f32 from vector<1x1x1xf32>
    %94 = vector.broadcast %93 : f32 to vector<1x1xf32>
    %95 = vector.broadcast %94 : vector<1x1xf32> to vector<8x128xf32>
    %96 = arith.addf %89, %95 : vector<8x128xf32>
    %c0_33 = arith.constant 0 : index
    %c0_34 = arith.constant 0 : index
    %97 = vector.load %arg5[%c0_33, %c0_34] : memref<8x128xf32, #tpu.memory_space<vmem>>, vector<8x128xf32>
    tpu.vector_store %arg5[%c0_33, %c0_34], %96 {strides = array<i32>} : memref<8x128xf32, #tpu.memory_space<vmem>>, vector<8x128xf32>,
    %c0_35 = arith.constant 0 : index
    %c0_36 = arith.constant 0 : index
    %98 = vector.load %arg6[%c0_35, %c0_36] : memref<8x128xf32, #tpu.memory_space<vmem>>, vector<8x128xf32>
    %99 = vector.shape_cast %79 : vector<1x8xf32> to vector<1x1x8xf32>
    %cst_37 = arith.constant dense<0.000000e+00> : vector<1xf32>
    %100 = vector.multi_reduction <add>, %99, %cst_37 [1, 2] : vector<1x1x8xf32> to vector<1xf32>
    %101 = vector.shape_cast %100 : vector<1xf32> to vector<1x1x1xf32>
    %102 = vector.extract %101[0, 0, 0] : f32 from vector<1x1x1xf32>
    %103 = vector.broadcast %102 : f32 to vector<1x1xf32>
    %104 = vector.broadcast %103 : vector<1x1xf32> to vector<8x128xf32>
    %105 = arith.addf %98, %104 : vector<8x128xf32>
    %c0_38 = arith.constant 0 : index
    %c0_39 = arith.constant 0 : index
    %106 = vector.load %arg6[%c0_38, %c0_39] : memref<8x128xf32, #tpu.memory_space<vmem>>, vector<8x128xf32>
    tpu.vector_store %arg6[%c0_38, %c0_39], %105 {strides = array<i32>} : memref<8x128xf32, #tpu.memory_space<vmem>>, vector<8x128xf32>,
    return
  }
  func.func @transform_0(%arg0: i32, %arg1: i32) -> (i32, i32) {
    %c1_i32 = arith.constant 1 : i32
    %0 = arith.muli %arg0, %c1_i32 : i32
    %1 = arith.addi %0, %arg1 : i32
    %c0_i32 = arith.constant 0 : i32
    %2 = arith.minsi %1, %c0_i32 : i32
    %c0_i32_0 = arith.constant 0 : i32
    %c0_i32_1 = arith.constant 0 : i32
    return %c0_i32_0, %2 : i32, i32
  }
  func.func @transform_1(%arg0: i32, %arg1: i32) -> (i32, i32) {
    %c1_i32 = arith.constant 1 : i32
    %0 = arith.muli %arg0, %c1_i32 : i32
    %1 = arith.addi %0, %arg1 : i32
    %c0_i32 = arith.constant 0 : i32
    %2 = arith.minsi %1, %c0_i32 : i32
    %c0_i32_0 = arith.constant 0 : i32
    %c0_i32_1 = arith.constant 0 : i32
    return %c0_i32_0, %2 : i32, i32
  }
  func.func @transform_2(%arg0: i32, %arg1: i32) -> (i32, i32) {
    %c0_i32 = arith.constant 0 : i32
    %c0_i32_0 = arith.constant 0 : i32
    return %arg0, %c0_i32 : i32, i32
  }
  func.func @transform_3(%arg0: i32, %arg1: i32) -> (i32, i32) {
    %c0_i32 = arith.constant 0 : i32
    %c0_i32_0 = arith.constant 0 : i32
    return %arg0, %c0_i32 : i32, i32
  }
  func.func @transform_4(%arg0: i32, %arg1: i32) -> (i32, i32) {
    %c0_i32 = arith.constant 0 : i32
    %c0_i32_0 = arith.constant 0 : i32
    return %arg0, %c0_i32 : i32, i32
  }
}

</mosaic_0001>

<llo_original>
// kernel: tpu_custom_call.1
$region0: #{tpu_custom_call.1}
  #allocation0 [shape = 'u32[]', space=smem, size = 0x4, offset = 0x4, fixed_abs, tag = 'smem constant byte address 0x4 - core index']
  #allocation1 [shape = 'u32[144,128]{1,0:T(1,128)}', space=vmem, size = 0x12000, scoped, tag = 'internal scratch']
  %s0 = inlined_call_operand.vmem [shape: f32[72,8], index: 0, kind: input, shape index: {}]
  %s1 = inlined_call_operand.vmem [shape: f32[72,8], index: 1, kind: input, shape index: {}]
  %s2 = inlined_call_operand.hbm [shape: f32[8,128], index: 2, kind: output, shape index: {0}]
  %s3 = inlined_call_operand.hbm [shape: f32[8,128], index: 3, kind: output, shape index: {1}]
  %s4 = inlined_call_operand.hbm [shape: f32[8,128], index: 4, kind: output, shape index: {2}]
  %5 = xla_tuple %s2, %s3, %s4
  %s6 = sld [smem:[#allocation0]]
  $region38: #{tpu_custom_call.1} parent=0
    _
  %s8 = ssub.s32 1, %s6
  %s9 = scalar_select 0, %s8, %s6
  $region1: #{tpu_custom_call.1} parent=0
    #allocation2 [shape = 'u8[4096]{0}', space=vmem, size = 0x1000, scoped, tag = 'output window, operand 0, single buffered']
    #allocation3 [shape = 's32[1]{0}', space=sflag, size = 0x4, scoped, tag = 'scoped memory for tpu_custom_call.1']
    #allocation4 [shape = 'u8[4096]{0}', space=vmem, size = 0x1000, scoped, tag = 'output window, operand 1, single buffered']
    #allocation5 [shape = 's32[1]{0}', space=sflag, size = 0x4, scoped, tag = 'scoped memory for tpu_custom_call.1']
    #allocation6 [shape = 'u8[4096]{0}', space=vmem, size = 0x1000, scoped, tag = 'output window, operand 2, single buffered']
    %10 = vsyncpa [#allocation3], 0
    %11 = vsyncpa [#allocation5], 0
    // Predicated region
    $region2: #{tpu_custom_call.1} parent=1 // pred_check
      _
    $region3: #{tpu_custom_call.1} parent=1 // pred_check_branch
      %13 = sbr.rel (0) target = $region5
    $region4: #{tpu_custom_call.1} parent=1 // pred_region
      %s14 = sadd.s32 0, 0
      %p15 = scmp.lt.s32.totalorder %s14, 0
      %s16 = scalar_select %p15, %s14, 0
      %p17 = scmp.lt.s32.totalorder %s16, 0
      %s18 = scalar_select %p17, %s16, 0
      %s19 = smul.addr %s18, 8
      %s20 = scalar_lea.vmem %s0, %s19
      %s21 = sadd.s32 0, 0
      %p22 = scmp.lt.s32.totalorder %s21, 0
      %s23 = scalar_select %p22, %s21, 0
    $region5: #{tpu_custom_call.1} parent=1 // pred_fallthru
      _
    // Predicated region
    $region6: #{tpu_custom_call.1} parent=1 // pred_check
      _
    $region7: #{tpu_custom_call.1} parent=1 // pred_check_branch
      %25 = sbr.rel (0) target = $region9
    $region8: #{tpu_custom_call.1} parent=1 // pred_region
      %s26 = sadd.s32 0, 0
      %p27 = scmp.lt.s32.totalorder %s26, 0
      %s28 = scalar_select %p27, %s26, 0
      %p29 = scmp.lt.s32.totalorder %s28, 0
      %s30 = scalar_select %p29, %s28, 0
      %s31 = smul.addr %s30, 8
      %s32 = scalar_lea.vmem %s1, %s31
      %s33 = sadd.s32 0, 0
      %p34 = scmp.lt.s32.totalorder %s33, 0
      %s35 = scalar_select %p34, %s33, 0
    $region9: #{tpu_custom_call.1} parent=1 // pred_fallthru
      _
    %s36 = sadd.s32 0, 0
    %p37 = scmp.lt.s32.totalorder %s36, 0
    %s38 = scalar_select %p37, %s36, 0
    %p39 = scmp.lt.s32.totalorder %s38, 0
    %s40 = scalar_select %p39, %s38, 0
    %s41 = smul.addr %s40, 8
    %s42 = scalar_lea.vmem %s0, %s41
    %s43 = sadd.s32 0, 0
    %p44 = scmp.lt.s32.totalorder %s43, 0
    %s45 = scalar_select %p44, %s43, 0
    %p46 = scmp.lt.s32.totalorder %s45, 0
    %s47 = scalar_select %p46, %s45, 0
    %s48 = smul.addr %s47, 8
    %s49 = scalar_lea.vmem %s1, %s48
    %s50 = sadd.s32 0, 0
    %p51 = scmp.lt.s32.totalorder %s50, 0
    %s52 = scalar_select %p51, %s50, 0
    %p53 = scmp.lt.s32.totalorder %s52, 0
    %s54 = scalar_select %p53, %s52, 0
    %s55 = smul.addr %s54, 8
    %s56 = scalar_lea.vmem %s0, %s55
    %s57 = sadd.s32 0, 0
    %p58 = scmp.lt.s32.totalorder %s57, 0
    %s59 = scalar_select %p58, %s57, 0
    %s60 = sadd.s32 0, 0
    %p61 = scmp.lt.s32.totalorder %s60, 0
    %s62 = scalar_select %p61, %s60, 0
    %p63 = scmp.lt.s32.totalorder %s62, 0
    %s64 = scalar_select %p63, %s62, 0
    %s65 = smul.addr %s64, 8
    %s66 = scalar_lea.vmem %s1, %s65
    %s67 = sadd.s32 0, 0
    %p68 = scmp.lt.s32.totalorder %s67, 0
    %s69 = scalar_select %p68, %s67, 0
    %p70 = scmp.eq.s32.totalorder 0, 0
    // Predicated region
    $region10: #{tpu_custom_call.1} parent=1 // pred_check
      %p71 = pneg %p70
    $region11: #{tpu_custom_call.1} parent=1 // pred_check_branch
      %73 = sbr.rel (%p71) target = $region13
    $region12: #{tpu_custom_call.1} parent=1 // pred_region
      %74 = vst [vmem:[#allocation2] sm:$0xff] 0.0
      %75 = vst [vmem:[#allocation4] sm:$0xff] 0.0
      %76 = vst [vmem:[#allocation6] sm:$0xff] 0.0
    $region13: #{tpu_custom_call.1} parent=1 // pred_fallthru
      _
    %v77 = vld [vmem:[%s56] sm:$0xff]
    %v78 = vld [vmem:[%s56 + $0x8] sm:$0xff]
    %v79 = vld [vmem:[%s56 + $0x10] sm:$0xff]
    %v80 = vld [vmem:[%s56 + $0x18] sm:$0xff]
    %v81 = vld [vmem:[%s56 + $0x20] sm:$0xff]
    %v82 = vld [vmem:[%s56 + $0x28] sm:$0xff]
    %v83 = vld [vmem:[%s56 + $0x30] sm:$0xff]
    %v84 = vld [vmem:[%s56 + $0x38] sm:$0xff]
    %v85 = vld [vmem:[%s56 + $0x40] sm:$0xff]
    %v86 = vld [vmem:[%s66] sm:$0xff]
    %v87 = vld [vmem:[%s66 + $0x8] sm:$0xff]
    %v88 = vld [vmem:[%s66 + $0x10] sm:$0xff]
    %v89 = vld [vmem:[%s66 + $0x18] sm:$0xff]
    %v90 = vld [vmem:[%s66 + $0x20] sm:$0xff]
    %v91 = vld [vmem:[%s66 + $0x28] sm:$0xff]
    %v92 = vld [vmem:[%s66 + $0x30] sm:$0xff]
    %v93 = vld [vmem:[%s66 + $0x38] sm:$0xff]
    %v94 = vld [vmem:[%s66 + $0x40] sm:$0xff]
    %vm104 = vcmask 1041408
    %v105 = vrot.slane %v77, 6
    %v106 = vrot.slane %v78, 6
    %v107 = vsel %vm104, %v105, %v106
    %v108 = vrot.slane %v79, 6
    %v109 = vsel %vm104, %v106, %v108
    %v110 = vrot.slane %v80, 6
    %v111 = vsel %vm104, %v108, %v110
    %v112 = vrot.slane %v81, 6
    %v113 = vsel %vm104, %v110, %v112
    %v114 = vrot.slane %v82, 6
    %v115 = vsel %vm104, %v112, %v114
    %v116 = vrot.slane %v83, 6
    %v117 = vsel %vm104, %v114, %v116
    %v118 = vrot.slane %v84, 6
    %v119 = vsel %vm104, %v116, %v118
    %v120 = vrot.slane %v85, 6
    %v121 = vsel %vm104, %v118, %v120
    %v131 = vsub.f32 %v77, %v105
    %v132 = vsub.f32 %v78, %v107
    %v133 = vsub.f32 %v79, %v109
    %v134 = vsub.f32 %v80, %v111
    %v135 = vsub.f32 %v81, %v113
    %v136 = vsub.f32 %v82, %v115
    %v137 = vsub.f32 %v83, %v117
    %v138 = vsub.f32 %v84, %v119
    %v139 = vsub.f32 %v85, %v121
    %v141 = vrot.slane %v131, 2
    %vm151 = vcmask 1046528
    %v152 = vrot.slane %v131, 1
    %v153 = vrot.slane %v132, 1
    %v154 = vsel %vm151, %v152, %v153
    %v155 = vrot.slane %v133, 1
    %v156 = vsel %vm151, %v153, %v155
    %v157 = vrot.slane %v134, 1
    %v158 = vsel %vm151, %v155, %v157
    %v159 = vrot.slane %v135, 1
    %v160 = vsel %vm151, %v157, %v159
    %v161 = vrot.slane %v136, 1
    %v162 = vsel %vm151, %v159, %v161
    %v163 = vrot.slane %v137, 1
    %v164 = vsel %vm151, %v161, %v163
    %v165 = vrot.slane %v138, 1
    %v166 = vsel %vm151, %v163, %v165
    %v167 = vrot.slane %v139, 1
    %v168 = vsel %vm151, %v165, %v167
    %vm178 = vcmask 1040384
    %v179 = vsel %vm178, %v141, %v154
    %v180 = vsel %vm151, %v167, %v139
    %v181 = vmul.f32 %v179, 2.9092898
    %v182 = vmul.f32 %v156, 2.9092898
    %v183 = vmul.f32 %v158, 2.9092898
    %v184 = vmul.f32 %v160, 2.9092898
    %v185 = vmul.f32 %v162, 2.9092898
    %v186 = vmul.f32 %v164, 2.9092898
    %v187 = vmul.f32 %v166, 2.9092898
    %v188 = vmul.f32 %v168, 2.9092898
    %v189 = vmul.f32 %v180, 2.9092898
    %v190 = vmul.f32 %v181, %v179
    %v191 = vmul.f32 %v182, %v156
    %v192 = vmul.f32 %v183, %v158
    %v193 = vmul.f32 %v184, %v160
    %v194 = vmul.f32 %v185, %v162
    %v195 = vmul.f32 %v186, %v164
    %v196 = vmul.f32 %v187, %v166
    %v197 = vmul.f32 %v188, %v168
    %v198 = vmul.f32 %v189, %v180
    %v199 = vadd.f32 %v190, 8.789063e-05
    %v200 = vadd.f32 %v191, 8.789063e-05
    %v201 = vadd.f32 %v192, 8.789063e-05
    %v202 = vadd.f32 %v193, 8.789063e-05
    %v203 = vadd.f32 %v194, 8.789063e-05
    %v204 = vadd.f32 %v195, 8.789063e-05
    %v205 = vadd.f32 %v196, 8.789063e-05
    %v206 = vadd.f32 %v197, 8.789063e-05
    %v207 = vadd.f32 %v198, 8.789063e-05
    %v208 = vrsqrt.pop %v199
    %v209 = vmul.f32 %v199, %v208
    %vm210 = vcmp.eq.f32.partialorder %v199, inf
    %v211 = vsel %vm210, %v199, %v209
    %vm212 = vcmp.eq.f32.partialorder %v199, 0.0
    %v213 = vand.u32 %v199, 2147483648
    %v214 = vsel %vm212, %v213, %v211
    %v215 = vrsqrt.pop %v200
    %v216 = vmul.f32 %v200, %v215
    %vm217 = vcmp.eq.f32.partialorder %v200, inf
    %v218 = vsel %vm217, %v200, %v216
    %vm219 = vcmp.eq.f32.partialorder %v200, 0.0
    %v220 = vand.u32 %v200, 2147483648
    %v221 = vsel %vm219, %v220, %v218
    %v222 = vrsqrt.pop %v201
    %v223 = vmul.f32 %v201, %v222
    %vm224 = vcmp.eq.f32.partialorder %v201, inf
    %v225 = vsel %vm224, %v201, %v223
    %vm226 = vcmp.eq.f32.partialorder %v201, 0.0
    %v227 = vand.u32 %v201, 2147483648
    %v228 = vsel %vm226, %v227, %v225
    %v229 = vrsqrt.pop %v202
    %v230 = vmul.f32 %v202, %v229
    %vm231 = vcmp.eq.f32.partialorder %v202, inf
    %v232 = vsel %vm231, %v202, %v230
    %vm233 = vcmp.eq.f32.partialorder %v202, 0.0
    %v234 = vand.u32 %v202, 2147483648
    %v235 = vsel %vm233, %v234, %v232
    %v236 = vrsqrt.pop %v203
    %v237 = vmul.f32 %v203, %v236
    %vm238 = vcmp.eq.f32.partialorder %v203, inf
    %v239 = vsel %vm238, %v203, %v237
    %vm240 = vcmp.eq.f32.partialorder %v203, 0.0
    %v241 = vand.u32 %v203, 2147483648
    %v242 = vsel %vm240, %v241, %v239
    %v243 = vrsqrt.pop %v204
    %v244 = vmul.f32 %v204, %v243
    %vm245 = vcmp.eq.f32.partialorder %v204, inf
    %v246 = vsel %vm245, %v204, %v244
    %vm247 = vcmp.eq.f32.partialorder %v204, 0.0
    %v248 = vand.u32 %v204, 2147483648
    %v249 = vsel %vm247, %v248, %v246
    %v250 = vrsqrt.pop %v205
    %v251 = vmul.f32 %v205, %v250
    %vm252 = vcmp.eq.f32.partialorder %v205, inf
    %v253 = vsel %vm252, %v205, %v251
    %vm254 = vcmp.eq.f32.partialorder %v205, 0.0
    %v255 = vand.u32 %v205, 2147483648
    %v256 = vsel %vm254, %v255, %v253
    %v257 = vrsqrt.pop %v206
    %v258 = vmul.f32 %v206, %v257
    %vm259 = vcmp.eq.f32.partialorder %v206, inf
    %v260 = vsel %vm259, %v206, %v258
    %vm261 = vcmp.eq.f32.partialorder %v206, 0.0
    %v262 = vand.u32 %v206, 2147483648
    %v263 = vsel %vm261, %v262, %v260
    %v264 = vrsqrt.pop %v207
    %v265 = vmul.f32 %v207, %v264
    %vm266 = vcmp.eq.f32.partialorder %v207, inf
    %v267 = vsel %vm266, %v207, %v265
    %vm268 = vcmp.eq.f32.partialorder %v207, 0.0
    %v269 = vand.u32 %v207, 2147483648
    %v270 = vsel %vm268, %v269, %v267
    %v280 = vrot.slane %v86, 6
    %v281 = vrot.slane %v87, 6
    %v282 = vsel %vm104, %v280, %v281
    %v283 = vrot.slane %v88, 6
    %v284 = vsel %vm104, %v281, %v283
    %v285 = vrot.slane %v89, 6
    %v286 = vsel %vm104, %v283, %v285
    %v287 = vrot.slane %v90, 6
    %v288 = vsel %vm104, %v285, %v287
    %v289 = vrot.slane %v91, 6
    %v290 = vsel %vm104, %v287, %v289
    %v291 = vrot.slane %v92, 6
    %v292 = vsel %vm104, %v289, %v291
    %v293 = vrot.slane %v93, 6
    %v294 = vsel %vm104, %v291, %v293
    %v295 = vrot.slane %v94, 6
    %v296 = vsel %vm104, %v293, %v295
    %v306 = vsub.f32 %v86, %v280
    %v307 = vsub.f32 %v87, %v282
    %v308 = vsub.f32 %v88, %v284
    %v309 = vsub.f32 %v89, %v286
    %v310 = vsub.f32 %v90, %v288
    %v311 = vsub.f32 %v91, %v290
    %v312 = vsub.f32 %v92, %v292
    %v313 = vsub.f32 %v93, %v294
    %v314 = vsub.f32 %v94, %v296
    %v316 = vrot.slane %v306, 2
    %v326 = vrot.slane %v306, 1
    %v327 = vrot.slane %v307, 1
    %v328 = vsel %vm151, %v326, %v327
    %v329 = vrot.slane %v308, 1
    %v330 = vsel %vm151, %v327, %v329
    %v331 = vrot.slane %v309, 1
    %v332 = vsel %vm151, %v329, %v331
    %v333 = vrot.slane %v310, 1
    %v334 = vsel %vm151, %v331, %v333
    %v335 = vrot.slane %v311, 1
    %v336 = vsel %vm151, %v333, %v335
    %v337 = vrot.slane %v312, 1
    %v338 = vsel %vm151, %v335, %v337
    %v339 = vrot.slane %v313, 1
    %v340 = vsel %vm151, %v337, %v339
    %v341 = vrot.slane %v314, 1
    %v342 = vsel %vm151, %v339, %v341
    %v352 = vsel %vm178, %v316, %v328
    %v353 = vsel %vm151, %v341, %v314
    %v354 = vand.u32 2147483647, %v352
    %v355 = vand.u32 2147483647, %v330
    %v356 = vand.u32 2147483647, %v332
    %v357 = vand.u32 2147483647, %v334
    %v358 = vand.u32 2147483647, %v336
    %v359 = vand.u32 2147483647, %v338
    %v360 = vand.u32 2147483647, %v340
    %v361 = vand.u32 2147483647, %v342
    %v362 = vand.u32 2147483647, %v353
    %vm363 = vcmp.gt.f32.partialorder %v354, 6.097561
    %vm364 = vcmp.gt.f32.partialorder %v355, 6.097561
    %vm365 = vcmp.gt.f32.partialorder %v356, 6.097561
    %vm366 = vcmp.gt.f32.partialorder %v357, 6.097561
    %vm367 = vcmp.gt.f32.partialorder %v358, 6.097561
    %vm368 = vcmp.gt.f32.partialorder %v359, 6.097561
    %vm369 = vcmp.gt.f32.partialorder %v360, 6.097561
    %vm370 = vcmp.gt.f32.partialorder %v361, 6.097561
    %vm371 = vcmp.gt.f32.partialorder %v362, 6.097561
    %v372 = vsel %vm363, 0.0, %v352
    %v373 = vsel %vm364, 0.0, %v330
    %v374 = vsel %vm365, 0.0, %v332
    %v375 = vsel %vm366, 0.0, %v334
    %v376 = vsel %vm367, 0.0, %v336
    %v377 = vsel %vm368, 0.0, %v338
    %v378 = vsel %vm369, 0.0, %v340
    %v379 = vsel %vm370, 0.0, %v342
    %v380 = vsel %vm371, 0.0, %v353
    %v381 = vmul.f32 %v372, 2.9092898
    %v382 = vmul.f32 %v373, 2.9092898
    %v383 = vmul.f32 %v374, 2.9092898
    %v384 = vmul.f32 %v375, 2.9092898
    %v385 = vmul.f32 %v376, 2.9092898
    %v386 = vmul.f32 %v377, 2.9092898
    %v387 = vmul.f32 %v378, 2.9092898
    %v388 = vmul.f32 %v379, 2.9092898
    %v389 = vmul.f32 %v380, 2.9092898
    %v390 = vmul.f32 %v381, %v372
    %v391 = vmul.f32 %v382, %v373
    %v392 = vmul.f32 %v383, %v374
    %v393 = vmul.f32 %v384, %v375
    %v394 = vmul.f32 %v385, %v376
    %v395 = vmul.f32 %v386, %v377
    %v396 = vmul.f32 %v387, %v378
    %v397 = vmul.f32 %v388, %v379
    %v398 = vmul.f32 %v389, %v380
    %v399 = vadd.f32 %v390, 8.789063e-05
    %v400 = vadd.f32 %v391, 8.789063e-05
    %v401 = vadd.f32 %v392, 8.789063e-05
    %v402 = vadd.f32 %v393, 8.789063e-05
    %v403 = vadd.f32 %v394, 8.789063e-05
    %v404 = vadd.f32 %v395, 8.789063e-05
    %v405 = vadd.f32 %v396, 8.789063e-05
    %v406 = vadd.f32 %v397, 8.789063e-05
    %v407 = vadd.f32 %v398, 8.789063e-05
    %v408 = vrsqrt.pop %v399
    %v409 = vmul.f32 %v399, %v408
    %vm410 = vcmp.eq.f32.partialorder %v399, inf
    %v411 = vsel %vm410, %v399, %v409
    %vm412 = vcmp.eq.f32.partialorder %v399, 0.0
    %v413 = vand.u32 %v399, 2147483648
    %v414 = vsel %vm412, %v413, %v411
    %v415 = vrsqrt.pop %v400
    %v416 = vmul.f32 %v400, %v415
    %vm417 = vcmp.eq.f32.partialorder %v400, inf
    %v418 = vsel %vm417, %v400, %v416
    %vm419 = vcmp.eq.f32.partialorder %v400, 0.0
    %v420 = vand.u32 %v400, 2147483648
    %v421 = vsel %vm419, %v420, %v418
    %v422 = vrsqrt.pop %v401
    %v423 = vmul.f32 %v401, %v422
    %vm424 = vcmp.eq.f32.partialorder %v401, inf
    %v425 = vsel %vm424, %v401, %v423
    %vm426 = vcmp.eq.f32.partialorder %v401, 0.0
    %v427 = vand.u32 %v401, 2147483648
    %v428 = vsel %vm426, %v427, %v425
    %v429 = vrsqrt.pop %v402
    %v430 = vmul.f32 %v402, %v429
    %vm431 = vcmp.eq.f32.partialorder %v402, inf
    %v432 = vsel %vm431, %v402, %v430
    %vm433 = vcmp.eq.f32.partialorder %v402, 0.0
    %v434 = vand.u32 %v402, 2147483648
    %v435 = vsel %vm433, %v434, %v432
    %v436 = vrsqrt.pop %v403
    %v437 = vmul.f32 %v403, %v436
    %vm438 = vcmp.eq.f32.partialorder %v403, inf
    %v439 = vsel %vm438, %v403, %v437
    %vm440 = vcmp.eq.f32.partialorder %v403, 0.0
    %v441 = vand.u32 %v403, 2147483648
    %v442 = vsel %vm440, %v441, %v439
    %v443 = vrsqrt.pop %v404
    %v444 = vmul.f32 %v404, %v443
    %vm445 = vcmp.eq.f32.partialorder %v404, inf
    %v446 = vsel %vm445, %v404, %v444
    %vm447 = vcmp.eq.f32.partialorder %v404, 0.0
    %v448 = vand.u32 %v404, 2147483648
    %v449 = vsel %vm447, %v448, %v446
    %v450 = vrsqrt.pop %v405
    %v451 = vmul.f32 %v405, %v450
    %vm452 = vcmp.eq.f32.partialorder %v405, inf
    %v453 = vsel %vm452, %v405, %v451
    %vm454 = vcmp.eq.f32.partialorder %v405, 0.0
    %v455 = vand.u32 %v405, 2147483648
    %v456 = vsel %vm454, %v455, %v453
    %v457 = vrsqrt.pop %v406
    %v458 = vmul.f32 %v406, %v457
    %vm459 = vcmp.eq.f32.partialorder %v406, inf
    %v460 = vsel %vm459, %v406, %v458
    %vm461 = vcmp.eq.f32.partialorder %v406, 0.0
    %v462 = vand.u32 %v406, 2147483648
    %v463 = vsel %vm461, %v462, %v460
    %v464 = vrsqrt.pop %v407
    %v465 = vmul.f32 %v407, %v464
    %vm466 = vcmp.eq.f32.partialorder %v407, inf
    %v467 = vsel %vm466, %v407, %v465
    %vm468 = vcmp.eq.f32.partialorder %v407, 0.0
    %v469 = vand.u32 %v407, 2147483648
    %v470 = vsel %vm468, %v469, %v467
    %v471 = vsub.f32 %v77, %v214
    %v472 = vsub.f32 %v78, %v221
    %v473 = vsub.f32 %v79, %v228
    %v474 = vsub.f32 %v80, %v235
    %v475 = vsub.f32 %v81, %v242
    %v476 = vsub.f32 %v82, %v249
    %v477 = vsub.f32 %v83, %v256
    %v478 = vsub.f32 %v84, %v263
    %v479 = vsub.f32 %v85, %v270
    %v480 = vadd.f32 %v77, %v214
    %v481 = vadd.f32 %v78, %v221
    %v482 = vadd.f32 %v79, %v228
    %v483 = vadd.f32 %v80, %v235
    %v484 = vadd.f32 %v81, %v242
    %v485 = vadd.f32 %v82, %v249
    %v486 = vadd.f32 %v83, %v256
    %v487 = vadd.f32 %v84, %v263
    %v488 = vadd.f32 %v85, %v270
    %v489 = vsub.f32 %v86, %v414
    %v490 = vsub.f32 %v87, %v421
    %v491 = vsub.f32 %v88, %v428
    %v492 = vsub.f32 %v89, %v435
    %v493 = vsub.f32 %v90, %v442
    %v494 = vsub.f32 %v91, %v449
    %v495 = vsub.f32 %v92, %v456
    %v496 = vsub.f32 %v93, %v463
    %v497 = vsub.f32 %v94, %v470
    %v498 = vadd.f32 %v86, %v414
    %v499 = vadd.f32 %v87, %v421
    %v500 = vadd.f32 %v88, %v428
    %v501 = vadd.f32 %v89, %v435
    %v502 = vadd.f32 %v90, %v442
    %v503 = vadd.f32 %v91, %v449
    %v504 = vadd.f32 %v92, %v456
    %v505 = vadd.f32 %v93, %v463
    %v506 = vadd.f32 %v94, %v470
    %v507 = vmin.f32 %v480, %v498
    %v508 = vmin.f32 %v481, %v499
    %v509 = vmin.f32 %v482, %v500
    %v510 = vmin.f32 %v483, %v501
    %v511 = vmin.f32 %v484, %v502
    %v512 = vmin.f32 %v485, %v503
    %v513 = vmin.f32 %v486, %v504
    %v514 = vmin.f32 %v487, %v505
    %v515 = vmin.f32 %v488, %v506
    %v516 = vmax.f32 %v471, %v489
    %v517 = vmax.f32 %v472, %v490
    %v518 = vmax.f32 %v473, %v491
    %v519 = vmax.f32 %v474, %v492
    %v520 = vmax.f32 %v475, %v493
    %v521 = vmax.f32 %v476, %v494
    %v522 = vmax.f32 %v477, %v495
    %v523 = vmax.f32 %v478, %v496
    %v524 = vmax.f32 %v479, %v497
    %v525 = vsub.f32 %v507, %v516
    %v526 = vsub.f32 %v508, %v517
    %v527 = vsub.f32 %v509, %v518
    %v528 = vsub.f32 %v510, %v519
    %v529 = vsub.f32 %v511, %v520
    %v530 = vsub.f32 %v512, %v521
    %v531 = vsub.f32 %v513, %v522
    %v532 = vsub.f32 %v514, %v523
    %v533 = vsub.f32 %v515, %v524
    %v534 = vmax.f32 %v480, %v498
    %v535 = vmax.f32 %v481, %v499
    %v536 = vmax.f32 %v482, %v500
    %v537 = vmax.f32 %v483, %v501
    %v538 = vmax.f32 %v484, %v502
    %v539 = vmax.f32 %v485, %v503
    %v540 = vmax.f32 %v486, %v504
    %v541 = vmax.f32 %v487, %v505
    %v542 = vmax.f32 %v488, %v506
    %v543 = vmin.f32 %v471, %v489
    %v544 = vmin.f32 %v472, %v490
    %v545 = vmin.f32 %v473, %v491
    %v546 = vmin.f32 %v474, %v492
    %v547 = vmin.f32 %v475, %v493
    %v548 = vmin.f32 %v476, %v494
    %v549 = vmin.f32 %v477, %v495
    %v550 = vmin.f32 %v478, %v496
    %v551 = vmin.f32 %v479, %v497
    %v552 = vsub.f32 %v534, %v543
    %v553 = vsub.f32 %v535, %v544
    %v554 = vsub.f32 %v536, %v545
    %v555 = vsub.f32 %v537, %v546
    %v556 = vsub.f32 %v538, %v547
    %v557 = vsub.f32 %v539, %v548
    %v558 = vsub.f32 %v540, %v549
    %v559 = vsub.f32 %v541, %v550
    %v560 = vsub.f32 %v542, %v551
    %vm561 = vcmp.lt.f32.partialorder %v86, 0.0
    %vm562 = vcmp.lt.f32.partialorder %v87, 0.0
    %vm563 = vcmp.lt.f32.partialorder %v88, 0.0
    %vm564 = vcmp.lt.f32.partialorder %v89, 0.0
    %vm565 = vcmp.lt.f32.partialorder %v90, 0.0
    %vm566 = vcmp.lt.f32.partialorder %v91, 0.0
    %vm567 = vcmp.lt.f32.partialorder %v92, 0.0
    %vm568 = vcmp.lt.f32.partialorder %v93, 0.0
    %vm569 = vcmp.lt.f32.partialorder %v94, 0.0
    %vm570 = vcmp.ge.f32.partialorder %v86, 1.0
    %vm571 = vcmp.ge.f32.partialorder %v87, 1.0
    %vm572 = vcmp.ge.f32.partialorder %v88, 1.0
    %vm573 = vcmp.ge.f32.partialorder %v89, 1.0
    %vm574 = vcmp.ge.f32.partialorder %v90, 1.0
    %vm575 = vcmp.ge.f32.partialorder %v91, 1.0
    %vm576 = vcmp.ge.f32.partialorder %v92, 1.0
    %vm577 = vcmp.ge.f32.partialorder %v93, 1.0
    %vm578 = vcmp.ge.f32.partialorder %v94, 1.0
    %vm579 = vmor %vm561, %vm570
    %vm580 = vmor %vm562, %vm571
    %vm581 = vmor %vm563, %vm572
    %vm582 = vmor %vm564, %vm573
    %vm583 = vmor %vm565, %vm574
    %vm584 = vmor %vm566, %vm575
    %vm585 = vmor %vm567, %vm576
    %vm586 = vmor %vm568, %vm577
    %vm587 = vmor %vm569, %vm578
    %v588 = vsel %vm579, 0.0, %v525
    %v589 = vsel %vm580, 0.0, %v526
    %v590 = vsel %vm581, 0.0, %v527
    %v591 = vsel %vm582, 0.0, %v528
    %v592 = vsel %vm583, 0.0, %v529
    %v593 = vsel %vm584, 0.0, %v530
    %v594 = vsel %vm585, 0.0, %v531
    %v595 = vsel %vm586, 0.0, %v532
    %v596 = vsel %vm587, 0.0, %v533
    %v597 = vsel %vm579, 0.0, %v552
    %v598 = vsel %vm580, 0.0, %v553
    %v599 = vsel %vm581, 0.0, %v554
    %v600 = vsel %vm582, 0.0, %v555
    %v601 = vsel %vm583, 0.0, %v556
    %v602 = vsel %vm584, 0.0, %v557
    %v603 = vsel %vm585, 0.0, %v558
    %v604 = vsel %vm586, 0.0, %v559
    %v605 = vsel %vm587, 0.0, %v560
    %vm606 = vcmask 64512
    %v607 = vsel %vm606, %v588, 0.0
    %v608 = vsel %vm606, %v589, 0.0
    %v609 = vadd.f32 %v607, %v608
    %v610 = vsel %vm606, %v590, 0.0
    %v611 = vadd.f32 %v609, %v610
    %v612 = vsel %vm606, %v591, 0.0
    %v613 = vadd.f32 %v611, %v612
    %v614 = vsel %vm606, %v592, 0.0
    %v615 = vadd.f32 %v613, %v614
    %v616 = vsel %vm606, %v593, 0.0
    %v617 = vadd.f32 %v615, %v616
    %v618 = vsel %vm606, %v594, 0.0
    %v619 = vadd.f32 %v617, %v618
    %v620 = vsel %vm606, %v595, 0.0
    %v621 = vadd.f32 %v619, %v620
    %v622 = vsel %vm606, %v596, 0.0
    %v623 = vadd.f32 %v621, %v622
    %v624 = vrot.slane %v623, 4
    %v625 = vadd.f32 %v623, %v624
    %v626 = vrot.slane %v625, 2
    %v627 = vadd.f32 %v625, %v626
    %v628 = vrot.slane %v627, 1
    %v629 = vadd.f32 %v627, %v628
    %v630 = vsel %vm606, %v597, 0.0
    %v631 = vsel %vm606, %v598, 0.0
    %v632 = vadd.f32 %v630, %v631
    %v633 = vsel %vm606, %v599, 0.0
    %v634 = vadd.f32 %v632, %v633
    %v635 = vsel %vm606, %v600, 0.0
    %v636 = vadd.f32 %v634, %v635
    %v637 = vsel %vm606, %v601, 0.0
    %v638 = vadd.f32 %v636, %v637
    %v639 = vsel %vm606, %v602, 0.0
    %v640 = vadd.f32 %v638, %v639
    %v641 = vsel %vm606, %v603, 0.0
    %v642 = vadd.f32 %v640, %v641
    %v643 = vsel %vm606, %v604, 0.0
    %v644 = vadd.f32 %v642, %v643
    %v645 = vsel %vm606, %v605, 0.0
    %v646 = vadd.f32 %v644, %v645
    %v647 = vrot.slane %v646, 4
    %v648 = vadd.f32 %v646, %v647
    %v649 = vrot.slane %v648, 2
    %v650 = vadd.f32 %v648, %v649
    %v651 = vrot.slane %v650, 1
    %v652 = vadd.f32 %v650, %v651
    %v653 = vadd.f32 %v652, 1e-09
    %v654 = vrcp.pop %v653
    %v655 = vmul.f32 %v629, %v654
    %v656 = vsub.f32 %v77, %v86
    %v657 = vsub.f32 %v78, %v87
    %v658 = vsub.f32 %v79, %v88
    %v659 = vsub.f32 %v80, %v89
    %v660 = vsub.f32 %v81, %v90
    %v661 = vsub.f32 %v82, %v91
    %v662 = vsub.f32 %v83, %v92
    %v663 = vsub.f32 %v84, %v93
    %v664 = vsub.f32 %v85, %v94
    %v665 = vmax.f32 %v656, 0.0
    %v666 = vmax.f32 %v657, 0.0
    %v667 = vmax.f32 %v658, 0.0
    %v668 = vmax.f32 %v659, 0.0
    %v669 = vmax.f32 %v660, 0.0
    %v670 = vmax.f32 %v661, 0.0
    %v671 = vmax.f32 %v662, 0.0
    %v672 = vmax.f32 %v663, 0.0
    %v673 = vmax.f32 %v664, 0.0
    %v674 = vsub.f32 15.0, %v665
    %v675 = vsub.f32 15.0, %v666
    %v676 = vsub.f32 15.0, %v667
    %v677 = vsub.f32 15.0, %v668
    %v678 = vsub.f32 15.0, %v669
    %v679 = vsub.f32 15.0, %v670
    %v680 = vsub.f32 15.0, %v671
    %v681 = vsub.f32 15.0, %v672
    %v682 = vsub.f32 15.0, %v673
    %v683 = vmin.f32 %v656, 0.0
    %v684 = vmin.f32 %v657, 0.0
    %v685 = vmin.f32 %v658, 0.0
    %v686 = vmin.f32 %v659, 0.0
    %v687 = vmin.f32 %v660, 0.0
    %v688 = vmin.f32 %v661, 0.0
    %v689 = vmin.f32 %v662, 0.0
    %v690 = vmin.f32 %v663, 0.0
    %v691 = vmin.f32 %v664, 0.0
    %v692 = vadd.f32 %v683, 15.0
    %v693 = vadd.f32 %v684, 15.0
    %v694 = vadd.f32 %v685, 15.0
    %v695 = vadd.f32 %v686, 15.0
    %v696 = vadd.f32 %v687, 15.0
    %v697 = vadd.f32 %v688, 15.0
    %v698 = vadd.f32 %v689, 15.0
    %v699 = vadd.f32 %v690, 15.0
    %v700 = vadd.f32 %v691, 15.0
    %vm701 = vcmp.ge.f32.partialorder %v86, 1640.0
    %vm702 = vcmp.ge.f32.partialorder %v87, 1640.0
    %vm703 = vcmp.ge.f32.partialorder %v88, 1640.0
    %vm704 = vcmp.ge.f32.partialorder %v89, 1640.0
    %vm705 = vcmp.ge.f32.partialorder %v90, 1640.0
    %vm706 = vcmp.ge.f32.partialorder %v91, 1640.0
    %vm707 = vcmp.ge.f32.partialorder %v92, 1640.0
    %vm708 = vcmp.ge.f32.partialorder %v93, 1640.0
    %vm709 = vcmp.ge.f32.partialorder %v94, 1640.0
    %vm710 = vmor %vm561, %vm701
    %vm711 = vmor %vm562, %vm702
    %vm712 = vmor %vm563, %vm703
    %vm713 = vmor %vm564, %vm704
    %vm714 = vmor %vm565, %vm705
    %vm715 = vmor %vm566, %vm706
    %vm716 = vmor %vm567, %vm707
    %vm717 = vmor %vm568, %vm708
    %vm718 = vmor %vm569, %vm709
    %v719 = vsel %vm710, 0.0, %v674
    %v720 = vsel %vm711, 0.0, %v675
    %v721 = vsel %vm712, 0.0, %v676
    %v722 = vsel %vm713, 0.0, %v677
    %v723 = vsel %vm714, 0.0, %v678
    %v724 = vsel %vm715, 0.0, %v679
    %v725 = vsel %vm716, 0.0, %v680
    %v726 = vsel %vm717, 0.0, %v681
    %v727 = vsel %vm718, 0.0, %v682
    %v728 = vsel %vm710, 0.0, %v692
    %v729 = vsel %vm711, 0.0, %v693
    %v730 = vsel %vm712, 0.0, %v694
    %v731 = vsel %vm713, 0.0, %v695
    %v732 = vsel %vm714, 0.0, %v696
    %v733 = vsel %vm715, 0.0, %v697
    %v734 = vsel %vm716, 0.0, %v698
    %v735 = vsel %vm717, 0.0, %v699
    %v736 = vsel %vm718, 0.0, %v700
    %v737 = vsel %vm606, %v719, 0.0
    %v738 = vsel %vm606, %v720, 0.0
    %v739 = vadd.f32 %v737, %v738
    %v740 = vsel %vm606, %v721, 0.0
    %v741 = vadd.f32 %v739, %v740
    %v742 = vsel %vm606, %v722, 0.0
    %v743 = vadd.f32 %v741, %v742
    %v744 = vsel %vm606, %v723, 0.0
    %v745 = vadd.f32 %v743, %v744
    %v746 = vsel %vm606, %v724, 0.0
    %v747 = vadd.f32 %v745, %v746
    %v748 = vsel %vm606, %v725, 0.0
    %v749 = vadd.f32 %v747, %v748
    %v750 = vsel %vm606, %v726, 0.0
    %v751 = vadd.f32 %v749, %v750
    %v752 = vsel %vm606, %v727, 0.0
    %v753 = vadd.f32 %v751, %v752
    %v754 = vrot.slane %v753, 4
    %v755 = vadd.f32 %v753, %v754
    %v756 = vrot.slane %v755, 2
    %v757 = vadd.f32 %v755, %v756
    %v758 = vrot.slane %v757, 1
    %v759 = vadd.f32 %v757, %v758
    %v760 = vsel %vm606, %v728, 0.0
    %v761 = vsel %vm606, %v729, 0.0
    %v762 = vadd.f32 %v760, %v761
    %v763 = vsel %vm606, %v730, 0.0
    %v764 = vadd.f32 %v762, %v763
    %v765 = vsel %vm606, %v731, 0.0
    %v766 = vadd.f32 %v764, %v765
    %v767 = vsel %vm606, %v732, 0.0
    %v768 = vadd.f32 %v766, %v767
    %v769 = vsel %vm606, %v733, 0.0
    %v770 = vadd.f32 %v768, %v769
    %v771 = vsel %vm606, %v734, 0.0
    %v772 = vadd.f32 %v770, %v771
    %v773 = vsel %vm606, %v735, 0.0
    %v774 = vadd.f32 %v772, %v773
    %v775 = vsel %vm606, %v736, 0.0
    %v776 = vadd.f32 %v774, %v775
    %v777 = vrot.slane %v776, 4
    %v778 = vadd.f32 %v776, %v777
    %v779 = vrot.slane %v778, 2
    %v780 = vadd.f32 %v778, %v779
    %v781 = vrot.slane %v780, 1
    %v782 = vadd.f32 %v780, %v781
    %v783 = vld [vmem:[#allocation2] sm:$0xff]
    %vm784 = vcmask 57344
    %v785 = vsel %vm784, %v655, 0.0
    %786 = vadd.xlane.f32.xlu0 %v785
    %v787 = vpop.xlane.xlu0 %786
    %v788 = vrot.slane %v787, 4
    %v789 = vadd.f32 %v787, %v788
    %v790 = vrot.slane %v789, 2
    %v791 = vadd.f32 %v789, %v790
    %v792 = vrot.slane %v791, 1
    %v793 = vadd.f32 %v791, %v792
    %s794 = vtos %v793
    %v795 = vstv %s794
    %v796 = vadd.f32 %v783, %v795
    %797 = vst [vmem:[#allocation2] sm:$0xff] %v796
    %v798 = vld [vmem:[#allocation4] sm:$0xff]
    %v799 = vsel %vm784, %v759, 0.0
    %800 = vadd.xlane.f32.xlu0 %v799
    %v801 = vpop.xlane.xlu0 %800
    %v802 = vrot.slane %v801, 4
    %v803 = vadd.f32 %v801, %v802
    %v804 = vrot.slane %v803, 2
    %v805 = vadd.f32 %v803, %v804
    %v806 = vrot.slane %v805, 1
    %v807 = vadd.f32 %v805, %v806
    %s808 = vtos %v807
    %v809 = vstv %s808
    %v810 = vadd.f32 %v798, %v809
    %811 = vst [vmem:[#allocation4] sm:$0xff] %v810
    %v812 = vld [vmem:[#allocation6] sm:$0xff]
    %v813 = vsel %vm784, %v782, 0.0
    %814 = vadd.xlane.f32.xlu0 %v813
    %v815 = vpop.xlane.xlu0 %814
    %v816 = vrot.slane %v815, 4
    %v817 = vadd.f32 %v815, %v816
    %v818 = vrot.slane %v817, 2
    %v819 = vadd.f32 %v817, %v818
    %v820 = vrot.slane %v819, 1
    %v821 = vadd.f32 %v819, %v820
    %s822 = vtos %v821
    %v823 = vstv %s822
    %v824 = vadd.f32 %v812, %v823
    %825 = vst [vmem:[#allocation6] sm:$0xff] %v824
    // Predicated region
    $region14: #{tpu_custom_call.1} parent=1 // pred_check
      _
    $region15: #{tpu_custom_call.1} parent=1 // pred_check_branch
      %827 = sbr.rel (0) target = $region17
    $region16: #{tpu_custom_call.1} parent=1 // pred_region
      %s829 = ssub.s32 128, 128
      %830 = vsyncadd [#allocation3], %s829
      %s832 = sshll.u32 [#allocation2], 4
      %s833 = int_to_ptr.vmem [resolvable:$true] %s832
      %835 = dma.vmem_to_hbm [thread:$0]  %s833, 128, %s2, [#allocation3]
    $region17: #{tpu_custom_call.1} parent=1 // pred_fallthru
      _
    // Predicated region
    $region18: #{tpu_custom_call.1} parent=1 // pred_check
      _
    $region19: #{tpu_custom_call.1} parent=1 // pred_check_branch
      %837 = sbr.rel (0) target = $region21
    $region20: #{tpu_custom_call.1} parent=1 // pred_region
      %s839 = ssub.s32 128, 128
      %840 = vsyncadd [#allocation5], %s839
      %s842 = sshll.u32 [#allocation4], 4
      %s843 = int_to_ptr.vmem [resolvable:$true] %s842
      %845 = dma.vmem_to_hbm [thread:$0]  %s843, 128, %s3, [#allocation5]
    $region21: #{tpu_custom_call.1} parent=1 // pred_fallthru
      _
    // Predicated region
    $region22: #{tpu_custom_call.1} parent=1 // pred_check
      _
    $region23: #{tpu_custom_call.1} parent=1 // pred_check_branch
      %847 = sbr.rel (0) target = $region25
    $region24: #{tpu_custom_call.1} parent=1 // pred_region
      %s849 = ssub.s32 128, 128
      %850 = vsyncadd [#allocation5], %s849
      %s852 = sshll.u32 [#allocation6], 4
      %s853 = int_to_ptr.vmem [resolvable:$true] %s852
      %855 = dma.vmem_to_hbm [thread:$0]  %s853, 128, %s4, [#allocation5]
    $region25: #{tpu_custom_call.1} parent=1 // pred_fallthru
      _
    // Predicated region
    $region26: #{tpu_custom_call.1} parent=1 // pred_check
      _
    $region27: #{tpu_custom_call.1} parent=1 // pred_check_branch
      %857 = sbr.rel (0) target = $region29
    $region28: #{tpu_custom_call.1} parent=1 // pred_region
      %858 = dma.done [#allocation3], 128
    $region29: #{tpu_custom_call.1} parent=1 // pred_fallthru
      _
    // Predicated region
    $region30: #{tpu_custom_call.1} parent=1 // pred_check
      _
    $region31: #{tpu_custom_call.1} parent=1 // pred_check_branch
      %860 = sbr.rel (0) target = $region33
    $region32: #{tpu_custom_call.1} parent=1 // pred_region
      %861 = dma.done [#allocation5], 128
    $region33: #{tpu_custom_call.1} parent=1 // pred_fallthru
      _
    // Predicated region
    $region34: #{tpu_custom_call.1} parent=1 // pred_check
      _
    $region35: #{tpu_custom_call.1} parent=1 // pred_check_branch
      %863 = sbr.rel (0) target = $region37
    $region36: #{tpu_custom_call.1} parent=1 // pred_region
      %864 = dma.done [#allocation5], 128
    $region37: #{tpu_custom_call.1} parent=1 // pred_fallthru
      _
    %865 = vsyncpa [#allocation3], 1
    %866 = vsyncpa [#allocation5], 1

</llo_original>
